<compile_context>
chip_gen: v6e
topology: v6e:2x2x1
jax: 0.10.0
libtpu: 0.0.40
codegen_flags: <defaults>
</compile_context>

<pallas_src>
import jax
import jax.numpy as jnp
from jax.experimental import pallas as pl
from jax.experimental.pallas import tpu as pltpu

# ----------------------------- configuration --------------------------------
B = 2                 # batch
S = 128               # sequence length (== max_seq_length, == lane width)
H = 64                # hidden_size
ANSWER_TYPES = 4
MAX_SEQ_LENGTH = S    # ignore_index for CrossEntropyLoss
LANE = 128            # TPU lane width
VOCAB = 512           # small synthetic vocab for the stub encoder
QA_ROWS = 8           # sublane-padded rows for the transposed QA head (rows 0/1 real)


def _vmem():
    return pl.BlockSpec(memory_space=pltpu.MemorySpace.VMEM)


def _smem():
    return pl.BlockSpec(memory_space=pltpu.MemorySpace.SMEM)


# ----------------------------- Pallas kernels --------------------------------
def heads_infer_kernel(tok_t_ref, tok0_ref, pooler_ref, wqa_ref, bqa_ref,
                       wac_ref, bac_ref, qa_ref, ac_ref):
    """Inference path: pooler + both heads, lane-dense outputs.

    tok_t_ref : [B, H, S]        f32   (tokens transposed: S on lanes)
    tok0_ref  : [B, H]           f32   (CLS-token embedding)
    pooler_ref: [H, H]           f32
    wqa_ref   : [QA_ROWS, H]     f32   (row 0 = start weights, row 1 = end weights)
    bqa_ref   : [QA_ROWS, 1]     f32
    wac_ref   : [H, LANE]        f32   (cols 0..ANSWER_TYPES-1 real)
    bac_ref   : [1, LANE]        f32
    qa_ref    : [B, QA_ROWS, S]  f32   (rows 0/1 = start/end logits, lane-dense)
    ac_ref    : [B, LANE]        f32
    """
    b_sz = tok_t_ref.shape[0]
    for b in range(b_sz):
        qa = jnp.dot(wqa_ref[...], tok_t_ref[b],
                     preferred_element_type=jnp.float32) + bqa_ref[...]
        qa_ref[b] = qa                               # full aligned (8,128) store
    cls = jnp.tanh(jnp.dot(tok0_ref[...], pooler_ref[...],
                           preferred_element_type=jnp.float32))
    ac_ref[...] = jnp.dot(cls, wac_ref[...],
                          preferred_element_type=jnp.float32) + bac_ref[...]


def fused_train_kernel(tok_t_ref, tok0_ref, pooler_ref, wqa_ref, bqa_ref,
                       wac_ref, bac_ref, sp_ref, ep_ref, ch_ref, out_ref):
    """Training path: pooler + heads + 3-way CrossEntropy fused in one kernel.

    sp_ref, ep_ref, ch_ref : [B] int32 in SMEM (start/end positions, answer choice)
    out_ref                : [1, 1] f32 (total_loss)
    """
    b_sz = tok_t_ref.shape[0]
    seq = tok_t_ref.shape[2]
    ignore = jnp.int32(MAX_SEQ_LENGTH)
    neg = jnp.float32(-1e30)

    # ---- heads (MXU) -------------------------------------------------------
    qa = [jnp.dot(wqa_ref[...], tok_t_ref[b],
                  preferred_element_type=jnp.float32) + bqa_ref[...]
          for b in range(b_sz)]                      # each [QA_ROWS, S], lane-dense
    cls = jnp.tanh(jnp.dot(tok0_ref[...], pooler_ref[...],
                           preferred_element_type=jnp.float32))
    ac = jnp.dot(cls, wac_ref[...],
                 preferred_element_type=jnp.float32) + bac_ref[...]   # [B, LANE]

    # ---- stack the three CE problems into one [R, 128] block ---------------
    # rows 0..B-1: start logits, B..2B-1: end logits, 2B..3B-1: answer-choice
    rows = [qa[b][0:1, :] for b in range(b_sz)]
    rows += [qa[b][1:2, :] for b in range(b_sz)]
    rows.append(ac)
    n_rows = 3 * b_sz
    pad = (-n_rows) % 8
    if pad:
        rows.append(jnp.zeros((pad, seq), jnp.float32))
    stacked = jnp.concatenate(rows, axis=0)          # [R, 128]
    r_tot = n_rows + pad

    rowc = jax.lax.broadcasted_iota(jnp.int32, (r_tot, 1), 0)
    col = jax.lax.broadcasted_iota(jnp.int32, (r_tot, seq), 1)

    # per-row targets from SMEM scalars (start/end clamped like the PyTorch code)
    tgt = jnp.full((r_tot, 1), ignore, dtype=jnp.int32)
    for b in range(b_sz):
        sp = jnp.clip(sp_ref[b], 0, MAX_SEQ_LENGTH)
        ep = jnp.clip(ep_ref[b], 0, MAX_SEQ_LENGTH)
        tgt = jnp.where(rowc == b, sp, tgt)
        tgt = jnp.where(rowc == b_sz + b, ep, tgt)
        tgt = jnp.where(rowc == 2 * b_sz + b, ch_ref[b], tgt)

    # valid column count per row: S for start/end rows, ANSWER_TYPES for AC rows
    ncols = jnp.where(rowc < 2 * b_sz, jnp.int32(seq), jnp.int32(ANSWER_TYPES))
    col_mask = col < ncols
    masked = jnp.where(col_mask, stacked, neg)

    m = jnp.max(masked, axis=1, keepdims=True)                               # [R,1]
    lse = m + jnp.log(jnp.sum(jnp.exp(masked - m), axis=1, keepdims=True))   # [R,1]
    picked = jnp.sum(jnp.where((col == tgt) & col_mask, stacked, 0.0),
                     axis=1, keepdims=True)                                  # [R,1]
    valid = (tgt != ignore).astype(jnp.float32)                              # [R,1]
    per_row = valid * (lse - picked)                                         # [R,1]

    def _group_mean(lo, hi):
        gm = ((rowc >= lo) & (rowc < hi)).astype(jnp.float32)
        gsum = jnp.sum(per_row * gm, axis=0, keepdims=True)                  # [1,1]
        gcnt = jnp.sum(valid * gm, axis=0, keepdims=True)                    # [1,1]
        return gsum / gcnt

    start_loss = _group_mean(0, b_sz)
    end_loss = _group_mean(b_sz, 2 * b_sz)
    ac_loss = _group_mean(2 * b_sz, 3 * b_sz)
    out_ref[...] = (ac_loss + start_loss + end_loss) / 3.0


# ----------------------------- wrappers ---------------------------------------
def _stub_encoder(params, input_ids, attention_mask):
    """Plain-JAX glue standing in for RobertaModel (inside the same jit)."""
    emb = params["embedding"][input_ids]                             # [B, S, H]
    tokens = emb * attention_mask[..., None].astype(emb.dtype)
    tok_t = jnp.transpose(tokens, (0, 2, 1))                         # [B, H, S]
    tok0 = tokens[:, 0, :]                                           # [B, H]
    return tok_t, tok0


@jax.jit
def forward_infer(params, input_ids, attention_mask):
    tok_t, tok0 = _stub_encoder(params, input_ids, attention_mask)
    qa, ac = pl.pallas_call(
        heads_infer_kernel,
        out_shape=(
            jax.ShapeDtypeStruct((B, QA_ROWS, S), jnp.float32),
            jax.ShapeDtypeStruct((B, LANE), jnp.float32),
        ),
        in_specs=[_vmem()] * 7,
        out_specs=(_vmem(), _vmem()),
    )(tok_t, tok0, params["pooler_w"], params["wqa_t"], params["bqa_col"],
      params["wac_pad"], params["bac_pad"])
    start_logits = qa[:, 0, :]
    end_logits = qa[:, 1, :]
    as_choice_logits = ac[:, :ANSWER_TYPES]
    return start_logits, end_logits, as_choice_logits


@jax.jit
def forward_train(params, input_ids, attention_mask,
                  start_positions, end_positions, ans_choices):
    tok_t, tok0 = _stub_encoder(params, input_ids, attention_mask)
    loss = pl.pallas_call(
        fused_train_kernel,
        out_shape=jax.ShapeDtypeStruct((1, 1), jnp.float32),
        in_specs=[_vmem()] * 7 + [_smem()] * 3,
        out_specs=_vmem(),
    )(tok_t, tok0, params["pooler_w"], params["wqa_t"], params["bqa_col"],
      params["wac_pad"], params["bac_pad"],
      start_positions.reshape(-1).astype(jnp.int32),
      end_positions.reshape(-1).astype(jnp.int32),
      ans_choices.reshape(-1).astype(jnp.int32))
    return loss[0, 0]


def basemodel_forward(params, input_ids, attention_mask,
                      start_positions=None, end_positions=None, ans_choices=None):
    if start_positions is not None and end_positions is not None:
        if start_positions.ndim > 1:
            start_positions = start_positions.squeeze(-1)
        if end_positions.ndim > 1:
            end_positions = end_positions.squeeze(-1)
        if ans_choices.ndim > 1:
            ans_choices = ans_choices.squeeze(-1)
        return forward_train(params, input_ids, attention_mask,
                             start_positions, end_positions, ans_choices)
    return forward_infer(params, input_ids, attention_mask)


# ----------------------------- reference (pure JAX) ---------------------------
def _ref_ce(logits, targets, ignore_index):
    lse = jax.nn.logsumexp(logits, axis=-1)
    safe_t = jnp.clip(targets, 0, logits.shape[-1] - 1)
    picked = jnp.take_along_axis(logits, safe_t[:, None], axis=-1)[:, 0]
    valid = (targets != ignore_index).astype(jnp.float32)
    return jnp.sum(valid * (lse - picked)) / jnp.sum(valid)


def reference_forward(params, input_ids, attention_mask, wqa, bqa, wac, bac):
    hi = jax.lax.Precision.HIGHEST
    emb = params["embedding"][input_ids]
    tokens = emb * attention_mask[..., None].astype(emb.dtype)
    cls = jnp.tanh(jnp.matmul(tokens[:, 0, :], params["pooler_w"], precision=hi))
    qa = jnp.matmul(tokens, wqa, precision=hi) + bqa                 # [B, S, 2]
    ac = jnp.matmul(cls, wac, precision=hi) + bac                    # [B, ANSWER_TYPES]
    return qa[..., 0], qa[..., 1], ac


# ----------------------------- main -------------------------------------------
if __name__ == "__main__":
    key = jax.random.PRNGKey(0)
    (k_emb, k_pool, k_wqa, k_bqa, k_wac, k_bac,
     k_ids, k_sp, k_ep, k_ch) = jax.random.split(key, 10)

    wqa = jax.random.normal(k_wqa, (H, 2), jnp.float32) * 0.05      # qa_outputs
    bqa = jax.random.normal(k_bqa, (2,), jnp.float32) * 0.05
    wac = jax.random.normal(k_wac, (H, ANSWER_TYPES), jnp.float32) * 0.05
    bac = jax.random.normal(k_bac, (ANSWER_TYPES,), jnp.float32) * 0.05

    params = {
        "embedding": jax.random.normal(k_emb, (VOCAB, H), jnp.float32) * 0.1,
        "pooler_w": jax.random.normal(k_pool, (H, H), jnp.float32) * 0.05,
        # transposed / padded head parameters for lane-dense kernel outputs
        "wqa_t": jnp.zeros((QA_ROWS, H), jnp.float32).at[:2, :].set(wqa.T),
        "bqa_col": jnp.zeros((QA_ROWS, 1), jnp.float32).at[:2, 0].set(bqa),
        "wac_pad": jnp.zeros((H, LANE), jnp.float32).at[:, :ANSWER_TYPES].set(wac),
        "bac_pad": jnp.zeros((1, LANE), jnp.float32).at[0, :ANSWER_TYPES].set(bac),
    }

    input_ids = jax.random.randint(k_ids, (B, S), 0, VOCAB, jnp.int32)
    attention_mask = jnp.ones((B, S), jnp.int32)
    start_positions = jax.random.randint(k_sp, (B,), 0, S, jnp.int32)
    end_positions = jax.random.randint(k_ep, (B,), 0, S, jnp.int32)
    ans_choices = jax.random.randint(k_ch, (B,), 0, ANSWER_TYPES, jnp.int32)

    # inference branch
    start_logits, end_logits, ac_logits = basemodel_forward(
        params, input_ids, attention_mask)
    jax.block_until_ready((start_logits, end_logits, ac_logits))
    assert start_logits.shape == (B, S)
    assert end_logits.shape == (B, S)
    assert ac_logits.shape == (B, ANSWER_TYPES)

    # training branch (single fused kernel → total loss)
    total_loss = basemodel_forward(params, input_ids, attention_mask,
                                   start_positions, end_positions, ans_choices)
    total_loss = jax.block_until_ready(total_loss)

    # pure-JAX reference check
    r_start, r_end, r_ac = reference_forward(params, input_ids, attention_mask,
                                             wqa, bqa, wac, bac)
    assert jnp.allclose(start_logits, r_start, atol=2e-3, rtol=2e-3)
    assert jnp.allclose(end_logits, r_end, atol=2e-3, rtol=2e-3)
    assert jnp.allclose(ac_logits, r_ac, atol=2e-3, rtol=2e-3)

    sp = jnp.clip(start_positions, 0, MAX_SEQ_LENGTH)
    ep = jnp.clip(end_positions, 0, MAX_SEQ_LENGTH)
    ref_loss = (_ref_ce(r_ac, ans_choices, MAX_SEQ_LENGTH)
                + _ref_ce(r_start, sp, MAX_SEQ_LENGTH)
                + _ref_ce(r_end, ep, MAX_SEQ_LENGTH)) / 3.0
    assert jnp.allclose(total_loss, ref_loss, atol=2e-3, rtol=2e-3), (total_loss,
                                                                      ref_loss)

    print("KERNEL_OK")
</pallas_src>

<mosaic_0001>
module attributes {stable_mosaic.version = 11 : i64} {
  func.func @heads_infer_kernel(%arg0: memref<2x64x128xf32, #tpu.memory_space<vmem>>, %arg1: memref<2x64xf32, #tpu.memory_space<vmem>>, %arg2: memref<64x64xf32, #tpu.memory_space<vmem>>, %arg3: memref<8x64xf32, #tpu.memory_space<vmem>>, %arg4: memref<8x1xf32, #tpu.memory_space<vmem>>, %arg5: memref<64x128xf32, #tpu.memory_space<vmem>>, %arg6: memref<1x128xf32, #tpu.memory_space<vmem>>, %arg7: memref<2x8x128xf32, #tpu.memory_space<vmem>>, %arg8: memref<2x128xf32, #tpu.memory_space<vmem>>) attributes {dimension_semantics = [], scalar_prefetch = 0 : i64, scratch_operands = 0 : i64, tpu.core_type = #tpu.core_type<tc>} {
    %c0 = arith.constant 0 : index
    %c0_0 = arith.constant 0 : index
    %0 = vector.load %arg3[%c0, %c0_0] : memref<8x64xf32, #tpu.memory_space<vmem>>, vector<8x64xf32>
    %c0_1 = arith.constant 0 : index
    %c0_2 = arith.constant 0 : index
    %c0_3 = arith.constant 0 : index
    %1 = vector.load %arg0[%c0_1, %c0_2, %c0_3] : memref<2x64x128xf32, #tpu.memory_space<vmem>>, vector<1x64x128xf32>
    %2 = vector.shape_cast %1 : vector<1x64x128xf32> to vector<64x128xf32>
    %cst = arith.constant dense<0.000000e+00> : vector<8x128xf32>
    %3 = tpu.matmul %0, %2, %cst {dimension_numbers = #tpu.dot_dimension_numbers<[1], [0], [0], [1], [0, 0, 1, 1], [], []>} : vector<8x64xf32>, vector<64x128xf32>, vector<8x128xf32> -> vector<8x128xf32>
    %c0_4 = arith.constant 0 : index
    %c0_5 = arith.constant 0 : index
    %4 = vector.load %arg4[%c0_4, %c0_5] : memref<8x1xf32, #tpu.memory_space<vmem>>, vector<8x1xf32>
    %5 = vector.broadcast %4 : vector<8x1xf32> to vector<8x128xf32>
    %6 = arith.addf %3, %5 : vector<8x128xf32>
    %c0_6 = arith.constant 0 : index
    %c0_7 = arith.constant 0 : index
    %c0_8 = arith.constant 0 : index
    %7 = vector.load %arg7[%c0_6, %c0_7, %c0_8] : memref<2x8x128xf32, #tpu.memory_space<vmem>>, vector<1x8x128xf32>
    %8 = vector.shape_cast %7 : vector<1x8x128xf32> to vector<8x128xf32>
    %9 = vector.shape_cast %6 : vector<8x128xf32> to vector<1x8x128xf32>
    tpu.vector_store %arg7[%c0_6, %c0_7, %c0_8], %9 {strides = array<i32>} : memref<2x8x128xf32, #tpu.memory_space<vmem>>, vector<1x8x128xf32>,
    %c0_9 = arith.constant 0 : index
    %c0_10 = arith.constant 0 : index
    %10 = vector.load %arg3[%c0_9, %c0_10] : memref<8x64xf32, #tpu.memory_space<vmem>>, vector<8x64xf32>
    %c1 = arith.constant 1 : index
    %c0_11 = arith.constant 0 : index
    %c0_12 = arith.constant 0 : index
    %11 = vector.load %arg0[%c1, %c0_11, %c0_12] : memref<2x64x128xf32, #tpu.memory_space<vmem>>, vector<1x64x128xf32>
    %12 = vector.shape_cast %11 : vector<1x64x128xf32> to vector<64x128xf32>
    %cst_13 = arith.constant dense<0.000000e+00> : vector<8x128xf32>
    %13 = tpu.matmul %10, %12, %cst_13 {dimension_numbers = #tpu.dot_dimension_numbers<[1], [0], [0], [1], [0, 0, 1, 1], [], []>} : vector<8x64xf32>, vector<64x128xf32>, vector<8x128xf32> -> vector<8x128xf32>
    %c0_14 = arith.constant 0 : index
    %c0_15 = arith.constant 0 : index
    %14 = vector.load %arg4[%c0_14, %c0_15] : memref<8x1xf32, #tpu.memory_space<vmem>>, vector<8x1xf32>
    %15 = vector.broadcast %14 : vector<8x1xf32> to vector<8x128xf32>
    %16 = arith.addf %13, %15 : vector<8x128xf32>
    %c1_16 = arith.constant 1 : index
    %c0_17 = arith.constant 0 : index
    %c0_18 = arith.constant 0 : index
    %17 = vector.load %arg7[%c1_16, %c0_17, %c0_18] : memref<2x8x128xf32, #tpu.memory_space<vmem>>, vector<1x8x128xf32>
    %18 = vector.shape_cast %17 : vector<1x8x128xf32> to vector<8x128xf32>
    %19 = vector.shape_cast %16 : vector<8x128xf32> to vector<1x8x128xf32>
    tpu.vector_store %arg7[%c1_16, %c0_17, %c0_18], %19 {strides = array<i32>} : memref<2x8x128xf32, #tpu.memory_space<vmem>>, vector<1x8x128xf32>,
    %c0_19 = arith.constant 0 : index
    %c0_20 = arith.constant 0 : index
    %20 = vector.load %arg1[%c0_19, %c0_20] : memref<2x64xf32, #tpu.memory_space<vmem>>, vector<2x64xf32>
    %c0_21 = arith.constant 0 : index
    %c0_22 = arith.constant 0 : index
    %21 = vector.load %arg2[%c0_21, %c0_22] : memref<64x64xf32, #tpu.memory_space<vmem>>, vector<64x64xf32>
    %cst_23 = arith.constant dense<0.000000e+00> : vector<2x64xf32>
    %22 = tpu.matmul %20, %21, %cst_23 {dimension_numbers = #tpu.dot_dimension_numbers<[1], [0], [0], [1], [0, 0, 1, 1], [], []>} : vector<2x64xf32>, vector<64x64xf32>, vector<2x64xf32> -> vector<2x64xf32>
    %23 = math.tanh %22 : vector<2x64xf32>
    %c0_24 = arith.constant 0 : index
    %c0_25 = arith.constant 0 : index
    %24 = vector.load %arg5[%c0_24, %c0_25] : memref<64x128xf32, #tpu.memory_space<vmem>>, vector<64x128xf32>
    %cst_26 = arith.constant dense<0.000000e+00> : vector<2x128xf32>
    %25 = tpu.matmul %23, %24, %cst_26 {dimension_numbers = #tpu.dot_dimension_numbers<[1], [0], [0], [1], [0, 0, 1, 1], [], []>} : vector<2x64xf32>, vector<64x128xf32>, vector<2x128xf32> -> vector<2x128xf32>
    %c0_27 = arith.constant 0 : index
    %c0_28 = arith.constant 0 : index
    %26 = vector.load %arg6[%c0_27, %c0_28] : memref<1x128xf32, #tpu.memory_space<vmem>>, vector<1x128xf32>
    %27 = vector.broadcast %26 : vector<1x128xf32> to vector<2x128xf32>
    %28 = arith.addf %25, %27 : vector<2x128xf32>
    %c0_29 = arith.constant 0 : index
    %c0_30 = arith.constant 0 : index
    %29 = vector.load %arg8[%c0_29, %c0_30] : memref<2x128xf32, #tpu.memory_space<vmem>>, vector<2x128xf32>
    tpu.vector_store %arg8[%c0_29, %c0_30], %28 {strides = array<i32>} : memref<2x128xf32, #tpu.memory_space<vmem>>, vector<2x128xf32>,
    return
  }
}

</mosaic_0001>

<llo_original>
// kernel: forward_infer.1
$region0: #{forward_infer.1}
  #allocation0 [shape = 'u32[]', space=smem, size = 0x4, offset = 0x4, fixed_abs, tag = 'smem constant byte address 0x4 - core index']
  #allocation1 [shape = 'u32[144,128]{1,0:T(1,128)}', space=vmem, size = 0x12000, scoped, tag = 'internal scratch']
  %s0 = inlined_call_operand.vmem [shape: f32[2,64,128], index: 0, kind: input, shape index: {}]
  %s1 = inlined_call_operand.vmem [shape: f32[2,64], index: 1, kind: input, shape index: {}]
  %s2 = inlined_call_operand.vmem [shape: f32[64,64], index: 2, kind: input, shape index: {}]
  %s3 = inlined_call_operand.vmem [shape: f32[8,64], index: 3, kind: input, shape index: {}]
  %s4 = inlined_call_operand.vmem [shape: f32[8,1], index: 4, kind: input, shape index: {}]
  %s5 = inlined_call_operand.vmem [shape: f32[64,128], index: 5, kind: input, shape index: {}]
  %s6 = inlined_call_operand.vmem [shape: f32[1,128], index: 6, kind: input, shape index: {}]
  %s7 = inlined_call_operand.vmem [shape: f32[2,8,128], index: 7, kind: output, shape index: {0}]
  %s8 = inlined_call_operand.hbm [shape: f32[2,128], index: 8, kind: output, shape index: {1}]
  %9 = xla_tuple %s7, %s8
  %s10 = sld [smem:[#allocation0]]
  $region46: #{forward_infer.1} parent=0
    _
  %s12 = ssub.s32 1, %s10
  %s13 = scalar_select 0, %s12, %s10
  $region1: #{forward_infer.1} parent=0
    #allocation2 [shape = 'u8[1024]{0}', space=vmem, size = 0x400, scoped, tag = 'output window, operand 1, single buffered']
    #allocation3 [shape = 's32[1]{0}', space=sflag, size = 0x4, scoped, tag = 'scoped memory for forward_infer.1']
    %14 = vsyncpa [#allocation3], 0
    // Predicated region
    $region2: #{forward_infer.1} parent=1 // pred_check
      _
    $region3: #{forward_infer.1} parent=1 // pred_check_branch
      %16 = sbr.rel (0) target = $region5
    $region4: #{forward_infer.1} parent=1 // pred_region
      _
    $region5: #{forward_infer.1} parent=1 // pred_fallthru
      _
    // Predicated region
    $region6: #{forward_infer.1} parent=1 // pred_check
      _
    $region7: #{forward_infer.1} parent=1 // pred_check_branch
      %18 = sbr.rel (0) target = $region9
    $region8: #{forward_infer.1} parent=1 // pred_region
      _
    $region9: #{forward_infer.1} parent=1 // pred_fallthru
      _
    // Predicated region
    $region10: #{forward_infer.1} parent=1 // pred_check
      _
    $region11: #{forward_infer.1} parent=1 // pred_check_branch
      %20 = sbr.rel (0) target = $region13
    $region12: #{forward_infer.1} parent=1 // pred_region
      _
    $region13: #{forward_infer.1} parent=1 // pred_fallthru
      _
    // Predicated region
    $region14: #{forward_infer.1} parent=1 // pred_check
      _
    $region15: #{forward_infer.1} parent=1 // pred_check_branch
      %22 = sbr.rel (0) target = $region17
    $region16: #{forward_infer.1} parent=1 // pred_region
      _
    $region17: #{forward_infer.1} parent=1 // pred_fallthru
      _
    // Predicated region
    $region18: #{forward_infer.1} parent=1 // pred_check
      _
    $region19: #{forward_infer.1} parent=1 // pred_check_branch
      %24 = sbr.rel (0) target = $region21
    $region20: #{forward_infer.1} parent=1 // pred_region
      _
    $region21: #{forward_infer.1} parent=1 // pred_fallthru
      _
    // Predicated region
    $region22: #{forward_infer.1} parent=1 // pred_check
      _
    $region23: #{forward_infer.1} parent=1 // pred_check_branch
      %26 = sbr.rel (0) target = $region25
    $region24: #{forward_infer.1} parent=1 // pred_region
      _
    $region25: #{forward_infer.1} parent=1 // pred_fallthru
      _
    // Predicated region
    $region26: #{forward_infer.1} parent=1 // pred_check
      _
    $region27: #{forward_infer.1} parent=1 // pred_check_branch
      %28 = sbr.rel (0) target = $region29
    $region28: #{forward_infer.1} parent=1 // pred_region
      _
    $region29: #{forward_infer.1} parent=1 // pred_fallthru
      _
    %v29 = vld [vmem:[%s3] sm:$0xff]
    %v30 = vld [vmem:[%s0] sm:$0xff]
    %v31 = vld [vmem:[%s0 + $0x8] sm:$0xff]
    %v32 = vld [vmem:[%s0 + $0x10] sm:$0xff]
    %v33 = vld [vmem:[%s0 + $0x18] sm:$0xff]
    %v34 = vld [vmem:[%s0 + $0x20] sm:$0xff]
    %v35 = vld [vmem:[%s0 + $0x28] sm:$0xff]
    %v36 = vld [vmem:[%s0 + $0x30] sm:$0xff]
    %v37 = vld [vmem:[%s0 + $0x38] sm:$0xff]
    %v38 = vld [vmem:[%s4] sm:$0xff]
    %40 = vset.pattern.permute.xlu0 0
    %41 = vperm.xlu0 %40, %v38
    %v42 = vpop.permute.xlu0 %41
    %vm44 = vcmask 523264
    %v46 = vsel %vm44, %v29, 0
    %48 = vmatprep.subr.mxu0 0.0
    %49 = vmatpush1.msra.mxu0 0.0
    %50 = vmatprep.subr.mxu0 0.0
    %51 = vmatpush1.msra.mxu0 0.0
    %52 = vmatprep.subr.mxu0 0.0
    %53 = vmatpush1.msra.mxu0 0.0
    %54 = vmatprep.subr.mxu0 0.0
    %55 = vmatpush1.msra.mxu0 0.0
    %56 = vmatprep.subr.mxu0 0.0
    %57 = vmatpush1.msra.mxu0 0.0
    %58 = vmatprep.subr.mxu0 0.0
    %59 = vmatpush1.msra.mxu0 0.0
    %60 = vmatprep.subr.mxu0 0.0
    %61 = vmatpush1.msra.mxu0 0.0
    %62 = vmatprep.subr.mxu0 0.0
    %63 = vmatpush1.msra.mxu0 0.0
    %64 = vmatprep.subr.mxu0 0.0
    %65 = vmatpush1.msra.mxu0 %v37
    %66 = vmatprep.subr.mxu0 0.0
    %67 = vmatpush1.msra.mxu0 %v36
    %68 = vmatprep.subr.mxu0 0.0
    %69 = vmatpush1.msra.mxu0 %v35
    %70 = vmatprep.subr.mxu0 0.0
    %71 = vmatpush1.msra.mxu0 %v34
    %72 = vmatprep.subr.mxu0 0.0
    %73 = vmatpush1.msra.mxu0 %v33
    %74 = vmatprep.subr.mxu0 0.0
    %75 = vmatpush1.msra.mxu0 %v32
    %76 = vmatprep.subr.mxu0 0.0
    %77 = vmatpush1.msra.mxu0 %v31
    %78 = vmatprep.subr.mxu0 0.0
    %79 = vmatpush1.msra.mxu0 %v30
    %80 = vmatprep.subr.mxu0 0.0
    %81 = vmatpush2.msra.mxu0 0.0
    %82 = vmatprep.subr.mxu0 0.0
    %83 = vmatpush2.msra.mxu0 0.0
    %84 = vmatprep.subr.mxu0 0.0
    %85 = vmatpush2.msra.mxu0 0.0
    %86 = vmatprep.subr.mxu0 0.0
    %87 = vmatpush2.msra.mxu0 0.0
    %88 = vmatprep.subr.mxu0 0.0
    %89 = vmatpush2.msra.mxu0 0.0
    %90 = vmatprep.subr.mxu0 0.0
    %91 = vmatpush2.msra.mxu0 0.0
    %92 = vmatprep.subr.mxu0 0.0
    %93 = vmatpush2.msra.mxu0 0.0
    %94 = vmatprep.subr.mxu0 0.0
    %95 = vmatpush2.msra.mxu0 0.0
    %96 = vmatprep.subr.mxu0 0.0
    %97 = vmatpush2.msra.mxu0 0.0
    %98 = vmatprep.subr.mxu0 0.0
    %99 = vmatpush2.msra.mxu0 0.0
    %100 = vmatprep.subr.mxu0 0.0
    %101 = vmatpush2.msra.mxu0 0.0
    %102 = vmatprep.subr.mxu0 0.0
    %103 = vmatpush2.msra.mxu0 0.0
    %104 = vmatprep.subr.mxu0 0.0
    %105 = vmatpush2.msra.mxu0 0.0
    %106 = vmatprep.subr.mxu0 0.0
    %107 = vmatpush2.msra.mxu0 0.0
    %108 = vmatprep.subr.mxu0 0.0
    %109 = vmatpush2.msra.mxu0 0.0
    %110 = vmatprep.subr.mxu0 0.0
    %111 = vmatpush2.msra.mxu0 0.0
    %112 = vmatprep.mubr.f32.mxu0 0.0
    %113 = vmatmul.mubr.f32.gmra.mxu0 %v46
    %v114 = vpop.f32.mrf.mxu0
    %v115 = vadd.f32 %v42, %v114
    %v116 = vpop.f32.mrf.mxu0
    %117 = vdwg.mxu0
    %118 = vst [vmem:[%s7] sm:$0xff] %v115
    %v119 = vld [vmem:[%s3] sm:$0xff]
    %s120 = scalar_lea.vmem %s0, 64
    %v121 = vld [vmem:[%s120] sm:$0xff]
    %v122 = vld [vmem:[%s120 + $0x8] sm:$0xff]
    %v123 = vld [vmem:[%s120 + $0x10] sm:$0xff]
    %v124 = vld [vmem:[%s120 + $0x18] sm:$0xff]
    %v125 = vld [vmem:[%s120 + $0x20] sm:$0xff]
    %v126 = vld [vmem:[%s120 + $0x28] sm:$0xff]
    %v127 = vld [vmem:[%s120 + $0x30] sm:$0xff]
    %v128 = vld [vmem:[%s120 + $0x38] sm:$0xff]
    %v129 = vld [vmem:[%s4] sm:$0xff]
    %131 = vset.pattern.permute.xlu0 0
    %132 = vperm.xlu0 %131, %v129
    %v133 = vpop.permute.xlu0 %132
    %v136 = vsel %vm44, %v119, 0
    %138 = vmatprep.subr.mxu0 0.0
    %139 = vmatpush1.msra.mxu0 0.0
    %140 = vmatprep.subr.mxu0 0.0
    %141 = vmatpush1.msra.mxu0 0.0
    %142 = vmatprep.subr.mxu0 0.0
    %143 = vmatpush1.msra.mxu0 0.0
    %144 = vmatprep.subr.mxu0 0.0
    %145 = vmatpush1.msra.mxu0 0.0
    %146 = vmatprep.subr.mxu0 0.0
    %147 = vmatpush1.msra.mxu0 0.0
    %148 = vmatprep.subr.mxu0 0.0
    %149 = vmatpush1.msra.mxu0 0.0
    %150 = vmatprep.subr.mxu0 0.0
    %151 = vmatpush1.msra.mxu0 0.0
    %152 = vmatprep.subr.mxu0 0.0
    %153 = vmatpush1.msra.mxu0 0.0
    %154 = vmatprep.subr.mxu0 0.0
    %155 = vmatpush1.msra.mxu0 %v128
    %156 = vmatprep.subr.mxu0 0.0
    %157 = vmatpush1.msra.mxu0 %v127
    %158 = vmatprep.subr.mxu0 0.0
    %159 = vmatpush1.msra.mxu0 %v126
    %160 = vmatprep.subr.mxu0 0.0
    %161 = vmatpush1.msra.mxu0 %v125
    %162 = vmatprep.subr.mxu0 0.0
    %163 = vmatpush1.msra.mxu0 %v124
    %164 = vmatprep.subr.mxu0 0.0
    %165 = vmatpush1.msra.mxu0 %v123
    %166 = vmatprep.subr.mxu0 0.0
    %167 = vmatpush1.msra.mxu0 %v122
    %168 = vmatprep.subr.mxu0 0.0
    %169 = vmatpush1.msra.mxu0 %v121
    %170 = vmatprep.subr.mxu0 0.0
    %171 = vmatpush2.msra.mxu0 0.0
    %172 = vmatprep.subr.mxu0 0.0
    %173 = vmatpush2.msra.mxu0 0.0
    %174 = vmatprep.subr.mxu0 0.0
    %175 = vmatpush2.msra.mxu0 0.0
    %176 = vmatprep.subr.mxu0 0.0
    %177 = vmatpush2.msra.mxu0 0.0
    %178 = vmatprep.subr.mxu0 0.0
    %179 = vmatpush2.msra.mxu0 0.0
    %180 = vmatprep.subr.mxu0 0.0
    %181 = vmatpush2.msra.mxu0 0.0
    %182 = vmatprep.subr.mxu0 0.0
    %183 = vmatpush2.msra.mxu0 0.0
    %184 = vmatprep.subr.mxu0 0.0
    %185 = vmatpush2.msra.mxu0 0.0
    %186 = vmatprep.subr.mxu0 0.0
    %187 = vmatpush2.msra.mxu0 0.0
    %188 = vmatprep.subr.mxu0 0.0
    %189 = vmatpush2.msra.mxu0 0.0
    %190 = vmatprep.subr.mxu0 0.0
    %191 = vmatpush2.msra.mxu0 0.0
    %192 = vmatprep.subr.mxu0 0.0
    %193 = vmatpush2.msra.mxu0 0.0
    %194 = vmatprep.subr.mxu0 0.0
    %195 = vmatpush2.msra.mxu0 0.0
    %196 = vmatprep.subr.mxu0 0.0
    %197 = vmatpush2.msra.mxu0 0.0
    %198 = vmatprep.subr.mxu0 0.0
    %199 = vmatpush2.msra.mxu0 0.0
    %200 = vmatprep.subr.mxu0 0.0
    %201 = vmatpush2.msra.mxu0 0.0
    %202 = vmatprep.mubr.f32.mxu0 0.0
    %203 = vmatmul.mubr.f32.gmra.mxu0 %v136
    %v204 = vpop.f32.mrf.mxu0
    %v205 = vadd.f32 %v133, %v204
    %v206 = vpop.f32.mrf.mxu0
    %207 = vdwg.mxu0
    %s208 = scalar_lea.vmem %s7, 8
    %209 = vst [vmem:[%s208] sm:$0xff] %v205
    %v210 = vld [vmem:[%s1] sm:$0x3]
    %v211 = vld [vmem:[%s2] sm:$0xff]
    %v212 = vld [vmem:[%s2 + $0x8] sm:$0xff]
    %v213 = vld [vmem:[%s2 + $0x10] sm:$0xff]
    %v214 = vld [vmem:[%s2 + $0x18] sm:$0xff]
    %v215 = vld [vmem:[%s2 + $0x20] sm:$0xff]
    %v216 = vld [vmem:[%s2 + $0x28] sm:$0xff]
    %v217 = vld [vmem:[%s2 + $0x30] sm:$0xff]
    %v218 = vld [vmem:[%s2 + $0x38] sm:$0xff]
    %v220 = vsel %vm44, %v210, 0
    %222 = vmatprep.subr.mxu0 0.0
    %223 = vmatpush1.msra.mxu0 0.0
    %224 = vmatprep.subr.mxu0 0.0
    %225 = vmatpush1.msra.mxu0 0.0
    %226 = vmatprep.subr.mxu0 0.0
    %227 = vmatpush1.msra.mxu0 0.0
    %228 = vmatprep.subr.mxu0 0.0
    %229 = vmatpush1.msra.mxu0 0.0
    %230 = vmatprep.subr.mxu0 0.0
    %231 = vmatpush1.msra.mxu0 0.0
    %232 = vmatprep.subr.mxu0 0.0
    %233 = vmatpush1.msra.mxu0 0.0
    %234 = vmatprep.subr.mxu0 0.0
    %235 = vmatpush1.msra.mxu0 0.0
    %236 = vmatprep.subr.mxu0 0.0
    %237 = vmatpush1.msra.mxu0 0.0
    %238 = vmatprep.subr.mxu0 0.0
    %239 = vmatpush1.msra.mxu0 %v218
    %240 = vmatprep.subr.mxu0 0.0
    %241 = vmatpush1.msra.mxu0 %v217
    %242 = vmatprep.subr.mxu0 0.0
    %243 = vmatpush1.msra.mxu0 %v216
    %244 = vmatprep.subr.mxu0 0.0
    %245 = vmatpush1.msra.mxu0 %v215
    %246 = vmatprep.subr.mxu0 0.0
    %247 = vmatpush1.msra.mxu0 %v214
    %248 = vmatprep.subr.mxu0 0.0
    %249 = vmatpush1.msra.mxu0 %v213
    %250 = vmatprep.subr.mxu0 0.0
    %251 = vmatpush1.msra.mxu0 %v212
    %252 = vmatprep.subr.mxu0 0.0
    %253 = vmatpush1.msra.mxu0 %v211
    %254 = vmatprep.subr.mxu0 0.0
    %255 = vmatpush2.msra.mxu0 0.0
    %256 = vmatprep.subr.mxu0 0.0
    %257 = vmatpush2.msra.mxu0 0.0
    %258 = vmatprep.subr.mxu0 0.0
    %259 = vmatpush2.msra.mxu0 0.0
    %260 = vmatprep.subr.mxu0 0.0
    %261 = vmatpush2.msra.mxu0 0.0
    %262 = vmatprep.subr.mxu0 0.0
    %263 = vmatpush2.msra.mxu0 0.0
    %264 = vmatprep.subr.mxu0 0.0
    %265 = vmatpush2.msra.mxu0 0.0
    %266 = vmatprep.subr.mxu0 0.0
    %267 = vmatpush2.msra.mxu0 0.0
    %268 = vmatprep.subr.mxu0 0.0
    %269 = vmatpush2.msra.mxu0 0.0
    %270 = vmatprep.subr.mxu0 0.0
    %271 = vmatpush2.msra.mxu0 0.0
    %272 = vmatprep.subr.mxu0 0.0
    %273 = vmatpush2.msra.mxu0 0.0
    %274 = vmatprep.subr.mxu0 0.0
    %275 = vmatpush2.msra.mxu0 0.0
    %276 = vmatprep.subr.mxu0 0.0
    %277 = vmatpush2.msra.mxu0 0.0
    %278 = vmatprep.subr.mxu0 0.0
    %279 = vmatpush2.msra.mxu0 0.0
    %280 = vmatprep.subr.mxu0 0.0
    %281 = vmatpush2.msra.mxu0 0.0
    %282 = vmatprep.subr.mxu0 0.0
    %283 = vmatpush2.msra.mxu0 0.0
    %284 = vmatprep.subr.mxu0 0.0
    %285 = vmatpush2.msra.mxu0 0.0
    %286 = vmatprep.mubr.f32.mxu0 0.0
    %287 = vmatmul.mubr.f32.gmra.mxu0 %v220
    %v288 = vpop.f32.mrf.mxu0
    %v289 = vadd.f32 0.0, %v288
    %v290 = vpop.f32.mrf.mxu0
    %291 = vdwg.mxu0
    %v292 = vtanh.pop %v289
    %v293 = vld [vmem:[%s5] sm:$0xff]
    %v294 = vld [vmem:[%s5 + $0x8] sm:$0xff]
    %v295 = vld [vmem:[%s5 + $0x10] sm:$0xff]
    %v296 = vld [vmem:[%s5 + $0x18] sm:$0xff]
    %v297 = vld [vmem:[%s5 + $0x20] sm:$0xff]
    %v298 = vld [vmem:[%s5 + $0x28] sm:$0xff]
    %v299 = vld [vmem:[%s5 + $0x30] sm:$0xff]
    %v300 = vld [vmem:[%s5 + $0x38] sm:$0xff]
    %v301 = vld [vmem:[%s6] sm:$0x1]
    %v303 = vlaneseq
    %v304 = vshrl.u32 %v303, 7
    %v305 = vsub.s32 0, %v304
    %v306 = vrot.slane %v301, %v305
    %v309 = vsel %vm44, %v292, 0
    %311 = vmatprep.subr.mxu0 0.0
    %312 = vmatpush1.msra.mxu0 0.0
    %313 = vmatprep.subr.mxu0 0.0
    %314 = vmatpush1.msra.mxu0 0.0
    %315 = vmatprep.subr.mxu0 0.0
    %316 = vmatpush1.msra.mxu0 0.0
    %317 = vmatprep.subr.mxu0 0.0
    %318 = vmatpush1.msra.mxu0 0.0
    %319 = vmatprep.subr.mxu0 0.0
    %320 = vmatpush1.msra.mxu0 0.0
    %321 = vmatprep.subr.mxu0 0.0
    %322 = vmatpush1.msra.mxu0 0.0
    %323 = vmatprep.subr.mxu0 0.0
    %324 = vmatpush1.msra.mxu0 0.0
    %325 = vmatprep.subr.mxu0 0.0
    %326 = vmatpush1.msra.mxu0 0.0
    %327 = vmatprep.subr.mxu0 0.0
    %328 = vmatpush1.msra.mxu0 %v300
    %329 = vmatprep.subr.mxu0 0.0
    %330 = vmatpush1.msra.mxu0 %v299
    %331 = vmatprep.subr.mxu0 0.0
    %332 = vmatpush1.msra.mxu0 %v298
    %333 = vmatprep.subr.mxu0 0.0
    %334 = vmatpush1.msra.mxu0 %v297
    %335 = vmatprep.subr.mxu0 0.0
    %336 = vmatpush1.msra.mxu0 %v296
    %337 = vmatprep.subr.mxu0 0.0
    %338 = vmatpush1.msra.mxu0 %v295
    %339 = vmatprep.subr.mxu0 0.0
    %340 = vmatpush1.msra.mxu0 %v294
    %341 = vmatprep.subr.mxu0 0.0
    %342 = vmatpush1.msra.mxu0 %v293
    %343 = vmatprep.subr.mxu0 0.0
    %344 = vmatpush2.msra.mxu0 0.0
    %345 = vmatprep.subr.mxu0 0.0
    %346 = vmatpush2.msra.mxu0 0.0
    %347 = vmatprep.subr.mxu0 0.0
    %348 = vmatpush2.msra.mxu0 0.0
    %349 = vmatprep.subr.mxu0 0.0
    %350 = vmatpush2.msra.mxu0 0.0
    %351 = vmatprep.subr.mxu0 0.0
    %352 = vmatpush2.msra.mxu0 0.0
    %353 = vmatprep.subr.mxu0 0.0
    %354 = vmatpush2.msra.mxu0 0.0
    %355 = vmatprep.subr.mxu0 0.0
    %356 = vmatpush2.msra.mxu0 0.0
    %357 = vmatprep.subr.mxu0 0.0
    %358 = vmatpush2.msra.mxu0 0.0
    %359 = vmatprep.subr.mxu0 0.0
    %360 = vmatpush2.msra.mxu0 0.0
    %361 = vmatprep.subr.mxu0 0.0
    %362 = vmatpush2.msra.mxu0 0.0
    %363 = vmatprep.subr.mxu0 0.0
    %364 = vmatpush2.msra.mxu0 0.0
    %365 = vmatprep.subr.mxu0 0.0
    %366 = vmatpush2.msra.mxu0 0.0
    %367 = vmatprep.subr.mxu0 0.0
    %368 = vmatpush2.msra.mxu0 0.0
    %369 = vmatprep.subr.mxu0 0.0
    %370 = vmatpush2.msra.mxu0 0.0
    %371 = vmatprep.subr.mxu0 0.0
    %372 = vmatpush2.msra.mxu0 0.0
    %373 = vmatprep.subr.mxu0 0.0
    %374 = vmatpush2.msra.mxu0 0.0
    %375 = vmatprep.mubr.f32.mxu0 0.0
    %376 = vmatmul.mubr.f32.gmra.mxu0 %v309
    %v377 = vpop.f32.mrf.mxu0
    %v378 = vadd.f32 %v306, %v377
    %v379 = vpop.f32.mrf.mxu0
    %380 = vdwg.mxu0
    %381 = vst [vmem:[#allocation2] sm:$0x3] %v378
    // Predicated region
    $region30: #{forward_infer.1} parent=1 // pred_check
      _
    $region31: #{forward_infer.1} parent=1 // pred_check_branch
      %383 = sbr.rel (0) target = $region33
    $region32: #{forward_infer.1} parent=1 // pred_region
      _
    $region33: #{forward_infer.1} parent=1 // pred_fallthru
      _
    // Predicated region
    $region34: #{forward_infer.1} parent=1 // pred_check
      _
    $region35: #{forward_infer.1} parent=1 // pred_check_branch
      %385 = sbr.rel (0) target = $region37
    $region36: #{forward_infer.1} parent=1 // pred_region
      %s387 = ssub.s32 32, 32
      %388 = vsyncadd [#allocation3], %s387
      %s390 = sshll.u32 [#allocation2], 4
      %s391 = int_to_ptr.vmem [resolvable:$true] %s390
      %393 = dma.vmem_to_hbm [thread:$0]  %s391, 32, %s8, [#allocation3]
    $region37: #{forward_infer.1} parent=1 // pred_fallthru
      _
    // Predicated region
    $region38: #{forward_infer.1} parent=1 // pred_check
      _
    $region39: #{forward_infer.1} parent=1 // pred_check_branch
      %395 = sbr.rel (0) target = $region41
    $region40: #{forward_infer.1} parent=1 // pred_region
      _
    $region41: #{forward_infer.1} parent=1 // pred_fallthru
      _
    // Predicated region
    $region42: #{forward_infer.1} parent=1 // pred_check
      _
    $region43: #{forward_infer.1} parent=1 // pred_check_branch
      %397 = sbr.rel (0) target = $region45
    $region44: #{forward_infer.1} parent=1 // pred_region
      %398 = dma.done [#allocation3], 32
    $region45: #{forward_infer.1} parent=1 // pred_fallthru
      _
    %399 = vsyncpa [#allocation3], 1

</llo_original>
